<compile_context>
chip_gen: v7x
topology: tpu7x:2x2x1
jax: 0.10.0
libtpu: 0.0.40
codegen_flags: <defaults>
</compile_context>

<pallas_src>
import math
from typing import NamedTuple, Optional

import jax
import jax.numpy as jnp
from jax.experimental import pallas as pl
from jax.experimental.pallas import tpu as pltpu

_MIB = 1024 * 1024


# --------------------------------------------------------------------------
# Helpers
# --------------------------------------------------------------------------
def _round_up(x: int, m: int) -> int:
    return ((x + m - 1) // m) * m


def _largest_tile(dim: int, candidates) -> int:
    """Largest candidate that divides `dim` (dim is always a 128-multiple)."""
    for c in candidates:
        if c <= dim and dim % c == 0:
            return c
    return dim


def _pad_cast_2d(a, rows: int, cols: int, dtype):
    """Zero-pad `a` to (rows, cols) and cast; no copy if already right."""
    r, c = a.shape
    if (r, c) == (rows, cols):
        return a if a.dtype == dtype else a.astype(dtype)
    out = jnp.zeros((rows, cols), dtype)
    return out.at[:r, :c].set(a.astype(dtype))


# --------------------------------------------------------------------------
# Kernels
# --------------------------------------------------------------------------
def _fused_gcn_bias_kernel(x_ref, w_ref, adj_ref, b_ref, o_ref):
    """Whole GCN layer in one VMEM-resident block: adj @ (x @ W) + bias."""
    support = jnp.dot(x_ref[...], w_ref[...], preferred_element_type=jnp.float32)
    out = jnp.dot(adj_ref[...], support.astype(adj_ref.dtype),
                  preferred_element_type=jnp.float32)
    o_ref[...] = (out + b_ref[...]).astype(o_ref.dtype)


def _fused_gcn_kernel(x_ref, w_ref, adj_ref, o_ref):
    support = jnp.dot(x_ref[...], w_ref[...], preferred_element_type=jnp.float32)
    out = jnp.dot(adj_ref[...], support.astype(adj_ref.dtype),
                  preferred_element_type=jnp.float32)
    o_ref[...] = out.astype(o_ref.dtype)


def _p1_stream_kernel(a_ref, b_ref, o_ref):
    """Pass-1 specialization: full reduction in one step, no accumulator."""
    o_ref[...] = jnp.dot(a_ref[...], b_ref[...],
                         preferred_element_type=jnp.float32).astype(o_ref.dtype)


def _mm_acc_bias_kernel(a_ref, b_ref, bias_ref, o_ref, acc_ref):
    """General (tm, tn) tile, accumulate over the k grid axis, bias on finalize."""
    k = pl.program_id(2)

    @pl.when(k == 0)
    def _init():
        acc_ref[...] = jnp.zeros_like(acc_ref)

    acc_ref[...] += jnp.dot(a_ref[...], b_ref[...],
                            preferred_element_type=jnp.float32)

    @pl.when(k == pl.num_programs(2) - 1)
    def _finalize():
        o_ref[...] = (acc_ref[...] + bias_ref[...]).astype(o_ref.dtype)


def _mm_acc_kernel(a_ref, b_ref, o_ref, acc_ref):
    k = pl.program_id(2)

    @pl.when(k == 0)
    def _init():
        acc_ref[...] = jnp.zeros_like(acc_ref)

    acc_ref[...] += jnp.dot(a_ref[...], b_ref[...],
                            preferred_element_type=jnp.float32)

    @pl.when(k == pl.num_programs(2) - 1)
    def _finalize():
        o_ref[...] = acc_ref[...].astype(o_ref.dtype)


# --------------------------------------------------------------------------
# pallas_call wrappers (operands must already be padded to tile multiples)
# --------------------------------------------------------------------------
def _fused_call(x_p, w_p, adj_p, bias_p, out_dtype):
    Mp, Kp = x_p.shape
    _, Fp = w_p.shape
    c_isz = x_p.dtype.itemsize
    o_isz = jnp.dtype(out_dtype).itemsize
    footprint = ((Mp * Mp + Mp * Kp + Kp * Fp) * c_isz
                 + Mp * Fp * (4 + o_isz) + Fp * 4)
    vmem_limit = int(min(max(4 * footprint, 16 * _MIB), 48 * _MIB))
    cost = pl.CostEstimate(
        flops=2 * Mp * Kp * Fp + 2 * Mp * Mp * Fp,
        transcendentals=0,
        bytes_accessed=(Mp * Mp + Mp * Kp + Kp * Fp) * c_isz
        + Mp * Fp * o_isz + Fp * 4,
    )
    if bias_p is not None:
        kernel, args = _fused_gcn_bias_kernel, (x_p, w_p, adj_p, bias_p)
    else:
        kernel, args = _fused_gcn_kernel, (x_p, w_p, adj_p)
    return pl.pallas_call(
        kernel,
        out_shape=jax.ShapeDtypeStruct((Mp, Fp), out_dtype),
        compiler_params=pltpu.CompilerParams(vmem_limit_bytes=vmem_limit),
        cost_estimate=cost,
    )(*args)


def _streaming_matmul(a_p, b_p, *, tm, out_dtype):
    """out = a_p @ b_p with b fully VMEM-resident; grid over rows only."""
    Mp, Kp = a_p.shape
    _, Np = b_p.shape
    assert Mp % tm == 0
    c_isz = a_p.dtype.itemsize
    o_isz = jnp.dtype(out_dtype).itemsize
    footprint = 2 * (tm * Kp + Kp * Np) * c_isz + 2 * tm * Np * o_isz
    vmem_limit = int(min(max(2 * footprint, 16 * _MIB), 48 * _MIB))
    cost = pl.CostEstimate(
        flops=2 * Mp * Np * Kp, transcendentals=0,
        bytes_accessed=Mp * Kp * c_isz + Kp * Np * c_isz + Mp * Np * o_isz)
    return pl.pallas_call(
        _p1_stream_kernel,
        out_shape=jax.ShapeDtypeStruct((Mp, Np), out_dtype),
        grid_spec=pltpu.PrefetchScalarGridSpec(
            num_scalar_prefetch=0,
            grid=(Mp // tm,),
            in_specs=[pl.BlockSpec((tm, Kp), lambda i: (i, 0)),
                      pl.BlockSpec((Kp, Np), lambda i: (0, 0))],
            out_specs=pl.BlockSpec((tm, Np), lambda i: (i, 0)),
        ),
        compiler_params=pltpu.CompilerParams(
            dimension_semantics=("parallel",),
            vmem_limit_bytes=vmem_limit,
        ),
        cost_estimate=cost,
    )(a_p, b_p)


def _tiled_matmul(a_p, b_p, bias_p, *, tm, tn, tk, out_dtype):
    """out = a_p @ b_p (+ bias) with an (i, j, k) grid and f32 VMEM accumulator."""
    Mp, Kp = a_p.shape
    Kp2, Np = b_p.shape
    assert Kp == Kp2 and Mp % tm == 0 and Np % tn == 0 and Kp % tk == 0
    grid = (Mp // tm, Np // tn, Kp // tk)
    a_isz = a_p.dtype.itemsize
    b_isz = b_p.dtype.itemsize
    o_isz = jnp.dtype(out_dtype).itemsize
    cost = pl.CostEstimate(
        flops=2 * Mp * Np * Kp,
        transcendentals=0,
        bytes_accessed=(grid[1] * Mp * Kp * a_isz      # A re-read per j tile
                        + grid[0] * Kp * Np * b_isz    # B re-read per i tile
                        + Mp * Np * o_isz
                        + (Np * 4 if bias_p is not None else 0)),
    )
    footprint = (2 * (tm * tk * a_isz + tk * tn * b_isz)   # double-buffered in
                 + 2 * tm * tn * o_isz                      # double-buffered out
                 + tm * tn * 4 + 2 * tn * 4)                # acc scratch + bias
    vmem_limit = int(min(max(2 * footprint, 24 * _MIB), 48 * _MIB))

    in_specs = [pl.BlockSpec((tm, tk), lambda i, j, k: (i, k)),
                pl.BlockSpec((tk, tn), lambda i, j, k: (k, j))]
    args = [a_p, b_p]
    if bias_p is not None:
        in_specs.append(pl.BlockSpec((1, tn), lambda i, j, k: (0, j)))
        args.append(bias_p)
        kernel = _mm_acc_bias_kernel
    else:
        kernel = _mm_acc_kernel

    return pl.pallas_call(
        kernel,
        out_shape=jax.ShapeDtypeStruct((Mp, Np), out_dtype),
        grid_spec=pltpu.PrefetchScalarGridSpec(
            num_scalar_prefetch=0,
            grid=grid,
            in_specs=in_specs,
            out_specs=pl.BlockSpec((tm, tn), lambda i, j, k: (i, j)),
            scratch_shapes=[pltpu.VMEM((tm, tn), jnp.float32)],
        ),
        compiler_params=pltpu.CompilerParams(
            dimension_semantics=("parallel", "parallel", "arbitrary"),
            vmem_limit_bytes=vmem_limit,
        ),
        cost_estimate=cost,
    )(*args)


# --------------------------------------------------------------------------
# Planning + forward
# --------------------------------------------------------------------------
class _Plan(NamedTuple):
    fused: bool
    Mp: int
    Kp: int
    Fp: int
    tm1: int = 0
    p1_streaming: bool = True
    tn1: int = 0
    tk1: int = 0
    tm2: int = 0
    tn2: int = 0
    tk2: int = 0


def _plan(N, F_in, F_out, compute_dtype, fuse_threshold_bytes):
    c_isz = jnp.dtype(compute_dtype).itemsize
    Mp128 = _round_up(N, 128)
    Kp = _round_up(F_in, 128)
    Fp = _round_up(F_out, 128)

    # Fused single-VMEM-block path for small problems (whole layer resident).
    fused_bytes = ((Mp128 * Mp128 + Mp128 * Kp + Kp * Fp) * c_isz
                   + Mp128 * Fp * (4 + 4) + Fp * 4)
    if fused_bytes <= fuse_threshold_bytes:
        return _Plan(fused=True, Mp=Mp128, Kp=Kp, Fp=Fp)

    # Tiled two-pass plan: node dim padded to 256 so >=256-aligned MXU steps
    # always exist; pass-2 streams adj exactly once (tn2 == full padded F_out).
    Mp = _round_up(N, 256)
    tk2 = _largest_tile(Mp, (1024, 512, 256))
    tm2 = _largest_tile(Mp, (512, 256))
    if Mp // tm2 == 1 and tm2 >= 256:
        tm2 //= 2            # keep >=2 row tiles -> both v7x TensorCores busy
    tn2 = Fp if Fp <= 512 else _largest_tile(Fp, (512, 256, 128))
    tm1 = _largest_tile(Mp, (512, 256))

    # Pass 1: single-k streaming variant whenever the full weight fits easily.
    p1_stream_bytes = 2 * (tm1 * Kp + Kp * Fp + tm1 * Fp) * c_isz
    if p1_stream_bytes <= 12 * _MIB:
        return _Plan(False, Mp, Kp, Fp, tm1=tm1, p1_streaming=True,
                     tm2=tm2, tn2=tn2, tk2=tk2)
    tk1 = _largest_tile(Kp, (512, 256, 128))
    tn1 = _largest_tile(Fp, (512, 256, 128))
    return _Plan(False, Mp, Kp, Fp, tm1=tm1, p1_streaming=False,
                 tn1=tn1, tk1=tk1, tm2=tm2, tn2=tn2, tk2=tk2)


def _gcn_forward(x, adj_p, w_p, bias_p, plan: _Plan, N, F_out, out_dtype):
    """adj_p / w_p / bias_p already padded & cast; only x is padded here."""
    cdt = adj_p.dtype
    x_p = _pad_cast_2d(x, plan.Mp, plan.Kp, cdt)

    if plan.fused:
        out_p = _fused_call(x_p, w_p, adj_p, bias_p, out_dtype)
    else:
        # Pass 1 (small): support = x @ W, written in compute dtype.
        if plan.p1_streaming:
            support_p = _streaming_matmul(x_p, w_p, tm=plan.tm1, out_dtype=cdt)
        else:
            support_p = _tiled_matmul(x_p, w_p, None, tm=plan.tm1, tn=plan.tn1,
                                      tk=plan.tk1, out_dtype=cdt)
        # Pass 2 (dominant, HBM-bound on adj): out = adj @ support + bias.
        out_p = _tiled_matmul(adj_p, support_p, bias_p, tm=plan.tm2,
                              tn=plan.tn2, tk=plan.tk2, out_dtype=out_dtype)
    return out_p[:N, :F_out]


def graph_convolution(x, adj, weight, bias=None, *, compute_dtype=jnp.bfloat16,
                      out_dtype=None, fuse_threshold_bytes=4 * _MIB):
    """Functional GraphConvolution.forward: adj @ (x @ weight) + bias."""
    N, F_in = x.shape
    assert adj.shape == (N, N)
    F_in2, F_out = weight.shape
    assert F_in == F_in2
    out_dtype = x.dtype if out_dtype is None else out_dtype

    plan = _plan(N, F_in, F_out, compute_dtype, fuse_threshold_bytes)
    adj_p = _pad_cast_2d(adj, plan.Mp, plan.Mp, compute_dtype)
    w_p = _pad_cast_2d(weight, plan.Kp, plan.Fp, compute_dtype)
    bias_p = None
    if bias is not None:
        bias_p = _pad_cast_2d(bias.reshape(1, F_out), 1, plan.Fp, jnp.float32)
    return _gcn_forward(x, adj_p, w_p, bias_p, plan, N, F_out, out_dtype)


class GraphConvolution:
    """GCN layer bound to a fixed adjacency; static operands padded/cast once
    at construction so no per-call HBM pad/convert pass over the N^2 matrix."""

    def __init__(self, adj, weight, bias=None, *, compute_dtype=jnp.bfloat16,
                 out_dtype=None, fuse_threshold_bytes=4 * _MIB):
        N = adj.shape[0]
        F_in, F_out = weight.shape
        self._N, self._F_in, self._F_out = N, F_in, F_out
        self._out_dtype = out_dtype
        self._plan = _plan(N, F_in, F_out, compute_dtype, fuse_threshold_bytes)
        p = self._plan
        self._adj_p = _pad_cast_2d(adj, p.Mp, p.Mp, compute_dtype)
        self._w_p = _pad_cast_2d(weight, p.Kp, p.Fp, compute_dtype)
        self._bias_p = (None if bias is None else
                        _pad_cast_2d(bias.reshape(1, F_out), 1, p.Fp, jnp.float32))

    def __call__(self, x):
        assert x.shape == (self._N, self._F_in)
        out_dtype = x.dtype if self._out_dtype is None else self._out_dtype
        return _gcn_forward(x, self._adj_p, self._w_p, self._bias_p, self._plan,
                            self._N, self._F_out, out_dtype)


class DOCSDecoderNet:
    """JAX/Pallas port of DOCSDecoderNet: forward(x) = self.features(x)."""
    # TODO(synk): `features` is an arbitrary user-supplied submodule in the
    # original; as before it is instantiated here as the GraphConvolution
    # layer from the same source file (the Pallas kernels above).

    def __init__(self, features):
        self.features = features

    def __call__(self, x):
        return self.features(x)


def init_params(key, in_features, out_features, bias=True, dtype=jnp.float32):
    """Matches GraphConvolution.reset_parameters: U(-stdv, stdv), stdv=1/sqrt(F_out)."""
    stdv = 1.0 / math.sqrt(out_features)
    kw, kb = jax.random.split(key)
    weight = jax.random.uniform(kw, (in_features, out_features), dtype=dtype,
                                minval=-stdv, maxval=stdv)
    b = (jax.random.uniform(kb, (out_features,), dtype=dtype,
                            minval=-stdv, maxval=stdv) if bias else None)
    return weight, b


def _reference(x, adj, weight, bias):
    hi = jax.lax.Precision.HIGHEST
    support = jnp.dot(x, weight, precision=hi)
    out = jnp.dot(adj, support, precision=hi)
    return out if bias is None else out + bias[None, :]


if __name__ == "__main__":
    key = jax.random.PRNGKey(0)
    ks = jax.random.split(key, 6)

    # --- small GCN shapes (as implied by the module) -> fused VMEM path ---
    N, F_IN, F_OUT = 8, 16, 32
    x = jax.random.normal(ks[0], (N, F_IN), dtype=jnp.float32)
    adj = jax.random.uniform(ks[1], (N, N), dtype=jnp.float32)
    weight, bias = init_params(ks[2], F_IN, F_OUT, bias=True)

    gcn = GraphConvolution(adj, weight, bias, compute_dtype=jnp.bfloat16)
    net = DOCSDecoderNet(gcn)
    out = jax.block_until_ready(net(x))
    ref = _reference(x, adj, weight, bias)
    assert out.shape == (N, F_OUT)
    # bf16 operands / f32 accumulation -> relaxed tolerance vs f32 reference.
    assert jnp.allclose(out, ref, atol=5e-2, rtol=5e-2), \
        float(jnp.max(jnp.abs(out - ref)))

    # --- larger shapes forced down the tiled two-pass path (padding, the
    #     streaming pass-1 and the (i, j, k) pass-2 grid), f32 compute ---
    N2, F_IN2, F_OUT2 = 1500, 384, 192
    x2 = jax.random.normal(ks[3], (N2, F_IN2), dtype=jnp.float32)
    adj2 = jax.random.uniform(ks[4], (N2, N2), dtype=jnp.float32)
    weight2, bias2 = init_params(ks[5], F_IN2, F_OUT2, bias=True)
    out2 = jax.block_until_ready(
        graph_convolution(x2, adj2, weight2, bias2, compute_dtype=jnp.float32,
                          fuse_threshold_bytes=0))
    ref2 = _reference(x2, adj2, weight2, bias2)
    assert out2.shape == (N2, F_OUT2)
    assert jnp.allclose(out2, ref2, atol=5e-2, rtol=5e-2), \
        float(jnp.max(jnp.abs(out2 - ref2)))

    print("KERNEL_OK")
</pallas_src>

<mosaic_0001>
module attributes {stable_mosaic.version = 11 : i64} {
  func.func @_fused_gcn_bias_kernel(%arg0: memref<128x128xbf16, #tpu.memory_space<vmem>>, %arg1: memref<128x128xbf16, #tpu.memory_space<vmem>>, %arg2: memref<128x128xbf16, #tpu.memory_space<vmem>>, %arg3: memref<1x128xf32, #tpu.memory_space<vmem>>, %arg4: memref<128x128xf32, #tpu.memory_space<vmem>>) attributes {dimension_semantics = [], scalar_prefetch = 0 : i64, scratch_operands = 0 : i64, tpu.core_type = #tpu.core_type<tc>} {
    %c0 = arith.constant 0 : index
    %c0_0 = arith.constant 0 : index
    %0 = vector.load %arg0[%c0, %c0_0] : memref<128x128xbf16, #tpu.memory_space<vmem>>, vector<128x128xbf16>
    %c0_1 = arith.constant 0 : index
    %c0_2 = arith.constant 0 : index
    %1 = vector.load %arg1[%c0_1, %c0_2] : memref<128x128xbf16, #tpu.memory_space<vmem>>, vector<128x128xbf16>
    %cst = arith.constant dense<0.000000e+00> : vector<128x128xf32>
    %2 = tpu.matmul %0, %1, %cst {dimension_numbers = #tpu.dot_dimension_numbers<[1], [0], [0], [1], [0, 0, 1, 1], [], []>} : vector<128x128xbf16>, vector<128x128xbf16>, vector<128x128xf32> -> vector<128x128xf32>
    %c0_3 = arith.constant 0 : index
    %c0_4 = arith.constant 0 : index
    %3 = vector.load %arg2[%c0_3, %c0_4] : memref<128x128xbf16, #tpu.memory_space<vmem>>, vector<128x128xbf16>
    %4 = arith.truncf %2 : vector<128x128xf32> to vector<128x128xbf16>
    %cst_5 = arith.constant dense<0.000000e+00> : vector<128x128xf32>
    %5 = tpu.matmul %3, %4, %cst_5 {dimension_numbers = #tpu.dot_dimension_numbers<[1], [0], [0], [1], [0, 0, 1, 1], [], []>} : vector<128x128xbf16>, vector<128x128xbf16>, vector<128x128xf32> -> vector<128x128xf32>
    %c0_6 = arith.constant 0 : index
    %c0_7 = arith.constant 0 : index
    %6 = vector.load %arg3[%c0_6, %c0_7] : memref<1x128xf32, #tpu.memory_space<vmem>>, vector<1x128xf32>
    %7 = vector.broadcast %6 : vector<1x128xf32> to vector<128x128xf32>
    %8 = arith.addf %5, %7 : vector<128x128xf32>
    %c0_8 = arith.constant 0 : index
    %c0_9 = arith.constant 0 : index
    %9 = vector.load %arg4[%c0_8, %c0_9] : memref<128x128xf32, #tpu.memory_space<vmem>>, vector<128x128xf32>
    tpu.vector_store %arg4[%c0_8, %c0_9], %8 {strides = array<i32>} : memref<128x128xf32, #tpu.memory_space<vmem>>, vector<128x128xf32>,
    return
  }
}

</mosaic_0001>

<llo_original>
// kernel: tpu_custom_call.1
$region0: #{tpu_custom_call.1}
  #allocation0 [shape = 'u32[]', space=smem, size = 0x4, offset = 0x4, fixed_abs, tag = 'smem constant byte address 0x4 - core index']
  #allocation1 [shape = 'u32[144,128]{1,0:T(1,128)}', space=vmem, size = 0x12000, scoped, tag = 'internal scratch']
  %s0 = inlined_call_operand.hbm [shape: bf16[128,128], index: 0, kind: input, shape index: {}]
  %s1 = inlined_call_operand.hbm [shape: bf16[128,128], index: 1, kind: input, shape index: {}]
  %s2 = inlined_call_operand.hbm [shape: bf16[128,128], index: 2, kind: input, shape index: {}]
  %s3 = inlined_call_operand.vmem [shape: f32[1,128], index: 3, kind: input, shape index: {}]
  %s4 = inlined_call_operand.hbm [shape: f32[128,128], index: 4, kind: output, shape index: {}]
  %s5 = sld [smem:[#allocation0]]
  $region38: #{tpu_custom_call.1} parent=0
    _
  %s7 = ssub.s32 1, %s5
  %s8 = scalar_select 0, %s7, %s5
  $region1: #{tpu_custom_call.1} parent=0
    #allocation2 [shape = 'u8[32768]{0}', space=vmem, size = 0x8000, scoped, tag = 'input window, operand 0, single buffered']
    #allocation3 [shape = 's32[1]{0}', space=sflag, size = 0x4, scoped, tag = 'scoped memory for tpu_custom_call.1']
    #allocation4 [shape = 's32[1]{0}', space=sflag, size = 0x4, scoped, tag = 'scoped memory for tpu_custom_call.1']
    #allocation5 [shape = 'u8[32768]{0}', space=vmem, size = 0x8000, scoped, tag = 'input window, operand 1, single buffered']
    #allocation6 [shape = 's32[1]{0}', space=sflag, size = 0x4, scoped, tag = 'scoped memory for tpu_custom_call.1']
    #allocation7 [shape = 'u8[32768]{0}', space=vmem, size = 0x8000, scoped, tag = 'input window, operand 2, single buffered']
    #allocation8 [shape = 'u8[65536]{0}', space=vmem, size = 0x10000, scoped, tag = 'output window, operand 0, single buffered']
    %9 = vsyncpa [#allocation3], 0
    %10 = vsyncpa [#allocation6], 0
    %11 = vsyncpa [#allocation4], 0
    // Predicated region
    $region2: #{tpu_custom_call.1} parent=1 // pred_check
      _
    $region3: #{tpu_custom_call.1} parent=1 // pred_check_branch
      %13 = sbr.rel (0) target = $region5
    $region4: #{tpu_custom_call.1} parent=1 // pred_region
      %s15 = ssub.s32 1024, 1024
      %16 = vsyncadd [#allocation3], %s15
      %s17 = sshll.u32 [#allocation2], 4
      %s18 = int_to_ptr.vmem [resolvable:$true] %s17
      %23 = dma.hbm_to_vmem [thread:$0]  %s0, 1024, %s18, [#allocation3], 64, 64, 4
    $region5: #{tpu_custom_call.1} parent=1 // pred_fallthru
      _
    // Predicated region
    $region6: #{tpu_custom_call.1} parent=1 // pred_check
      _
    $region7: #{tpu_custom_call.1} parent=1 // pred_check_branch
      %25 = sbr.rel (0) target = $region9
    $region8: #{tpu_custom_call.1} parent=1 // pred_region
      %s27 = ssub.s32 1024, 1024
      %28 = vsyncadd [#allocation6], %s27
      %s29 = sshll.u32 [#allocation5], 4
      %s30 = int_to_ptr.vmem [resolvable:$true] %s29
      %35 = dma.hbm_to_vmem [thread:$0]  %s1, 1024, %s30, [#allocation6], 64, 64, 4
    $region9: #{tpu_custom_call.1} parent=1 // pred_fallthru
      _
    // Predicated region
    $region10: #{tpu_custom_call.1} parent=1 // pred_check
      _
    $region11: #{tpu_custom_call.1} parent=1 // pred_check_branch
      %37 = sbr.rel (0) target = $region13
    $region12: #{tpu_custom_call.1} parent=1 // pred_region
      %s39 = ssub.s32 1024, 1024
      %40 = vsyncadd [#allocation6], %s39
      %s41 = sshll.u32 [#allocation7], 4
      %s42 = int_to_ptr.vmem [resolvable:$true] %s41
      %47 = dma.hbm_to_vmem [thread:$0]  %s2, 1024, %s42, [#allocation6], 64, 64, 4
    $region13: #{tpu_custom_call.1} parent=1 // pred_fallthru
      _
    // Predicated region
    $region14: #{tpu_custom_call.1} parent=1 // pred_check
      _
    $region15: #{tpu_custom_call.1} parent=1 // pred_check_branch
      %49 = sbr.rel (0) target = $region17
    $region16: #{tpu_custom_call.1} parent=1 // pred_region
      _
    $region17: #{tpu_custom_call.1} parent=1 // pred_fallthru
      _
    // Predicated region
    $region18: #{tpu_custom_call.1} parent=1 // pred_check
      _
    $region19: #{tpu_custom_call.1} parent=1 // pred_check_branch
      %51 = sbr.rel (0) target = $region21
    $region20: #{tpu_custom_call.1} parent=1 // pred_region
      %52 = dma.done [#allocation3], 1024
    $region21: #{tpu_custom_call.1} parent=1 // pred_fallthru
      _
    // Predicated region
    $region22: #{tpu_custom_call.1} parent=1 // pred_check
      _
    $region23: #{tpu_custom_call.1} parent=1 // pred_check_branch
      %54 = sbr.rel (0) target = $region25
    $region24: #{tpu_custom_call.1} parent=1 // pred_region
      %55 = dma.done [#allocation6], 1024
    $region25: #{tpu_custom_call.1} parent=1 // pred_fallthru
      _
    // Predicated region
    $region26: #{tpu_custom_call.1} parent=1 // pred_check
      _
    $region27: #{tpu_custom_call.1} parent=1 // pred_check_branch
      %57 = sbr.rel (0) target = $region29
    $region28: #{tpu_custom_call.1} parent=1 // pred_region
      %58 = dma.done [#allocation6], 1024
    $region29: #{tpu_custom_call.1} parent=1 // pred_fallthru
      _
    %v60 = vld [vmem:[#allocation2] sm:$0xf]
    %v61 = vld [vmem:[#allocation2 + $0x4] sm:$0xf]
    %v62 = vld [vmem:[#allocation2 + $0x8] sm:$0xf]
    %v63 = vld [vmem:[#allocation2 + $0xc] sm:$0xf]
    %v64 = vld [vmem:[#allocation2 + $0x10] sm:$0xf]
    %v65 = vld [vmem:[#allocation2 + $0x14] sm:$0xf]
    %v66 = vld [vmem:[#allocation2 + $0x18] sm:$0xf]
    %v67 = vld [vmem:[#allocation2 + $0x1c] sm:$0xf]
    %v68 = vld [vmem:[#allocation2 + $0x20] sm:$0xf]
    %v69 = vld [vmem:[#allocation2 + $0x24] sm:$0xf]
    %v70 = vld [vmem:[#allocation2 + $0x28] sm:$0xf]
    %v71 = vld [vmem:[#allocation2 + $0x2c] sm:$0xf]
    %v72 = vld [vmem:[#allocation2 + $0x30] sm:$0xf]
    %v73 = vld [vmem:[#allocation2 + $0x34] sm:$0xf]
    %v74 = vld [vmem:[#allocation2 + $0x38] sm:$0xf]
    %v75 = vld [vmem:[#allocation2 + $0x3c] sm:$0xf]
    %v76 = vld [vmem:[#allocation5] sm:$0xf]
    %v77 = vld [vmem:[#allocation5 + $0x4] sm:$0xf]
    %v78 = vld [vmem:[#allocation5 + $0x8] sm:$0xf]
    %v79 = vld [vmem:[#allocation5 + $0xc] sm:$0xf]
    %v80 = vld [vmem:[#allocation5 + $0x10] sm:$0xf]
    %v81 = vld [vmem:[#allocation5 + $0x14] sm:$0xf]
    %v82 = vld [vmem:[#allocation5 + $0x18] sm:$0xf]
    %v83 = vld [vmem:[#allocation5 + $0x1c] sm:$0xf]
    %v84 = vld [vmem:[#allocation5 + $0x20] sm:$0xf]
    %v85 = vld [vmem:[#allocation5 + $0x24] sm:$0xf]
    %v86 = vld [vmem:[#allocation5 + $0x28] sm:$0xf]
    %v87 = vld [vmem:[#allocation5 + $0x2c] sm:$0xf]
    %v88 = vld [vmem:[#allocation5 + $0x30] sm:$0xf]
    %v89 = vld [vmem:[#allocation5 + $0x34] sm:$0xf]
    %v90 = vld [vmem:[#allocation5 + $0x38] sm:$0xf]
    %v91 = vld [vmem:[#allocation5 + $0x3c] sm:$0xf]
    %v108 = vunpack.c.l.b16 %v60
    %v109 = vunpack.c.l.b16 %v61
    %v110 = vunpack.c.l.b16 %v62
    %v111 = vunpack.c.l.b16 %v63
    %v112 = vunpack.c.l.b16 %v64
    %v113 = vunpack.c.l.b16 %v65
    %v114 = vunpack.c.l.b16 %v66
    %v115 = vunpack.c.l.b16 %v67
    %v116 = vunpack.c.l.b16 %v68
    %v117 = vunpack.c.l.b16 %v69
    %v118 = vunpack.c.l.b16 %v70
    %v119 = vunpack.c.l.b16 %v71
    %v120 = vunpack.c.l.b16 %v72
    %v121 = vunpack.c.l.b16 %v73
    %v122 = vunpack.c.l.b16 %v74
    %v123 = vunpack.c.l.b16 %v75
    %v124 = vpack.c.b16 %v109, %v108
    %v125 = vpack.c.b16 %v111, %v110
    %v126 = vpack.c.b16 %v113, %v112
    %v127 = vpack.c.b16 %v115, %v114
    %v128 = vpack.c.b16 %v117, %v116
    %v129 = vpack.c.b16 %v119, %v118
    %v130 = vpack.c.b16 %v121, %v120
    %v131 = vpack.c.b16 %v123, %v122
    %v156 = vunpack.c.l.b16 %v76
    %v157 = vunpack.c.l.b16 %v77
    %v158 = vunpack.c.l.b16 %v78
    %v159 = vunpack.c.l.b16 %v79
    %v160 = vunpack.c.l.b16 %v80
    %v161 = vunpack.c.l.b16 %v81
    %v162 = vunpack.c.l.b16 %v82
    %v163 = vunpack.c.l.b16 %v83
    %v164 = vunpack.c.l.b16 %v84
    %v165 = vunpack.c.l.b16 %v85
    %v166 = vunpack.c.l.b16 %v86
    %v167 = vunpack.c.l.b16 %v87
    %v168 = vunpack.c.l.b16 %v88
    %v169 = vunpack.c.l.b16 %v89
    %v170 = vunpack.c.l.b16 %v90
    %v171 = vunpack.c.l.b16 %v91
    %v172 = vpack.c.b16 %v157, %v156
    %v173 = vpack.c.b16 %v159, %v158
    %v174 = vpack.c.b16 %v161, %v160
    %v175 = vpack.c.b16 %v163, %v162
    %v176 = vpack.c.b16 %v165, %v164
    %v177 = vpack.c.b16 %v167, %v166
    %v178 = vpack.c.b16 %v169, %v168
    %v179 = vpack.c.b16 %v171, %v170
    %188 = vmatprep.subr.bf16.mxu0 0
    %189 = vmatpush1.bf16.msra.mxu0 %v172
    %190 = vmatprep.subr.bf16.mxu0 0
    %191 = vmatpush1.bf16.msra.mxu0 %v173
    %192 = vmatprep.subr.bf16.mxu0 0
    %193 = vmatpush1.bf16.msra.mxu0 %v174
    %194 = vmatprep.subr.bf16.mxu0 0
    %195 = vmatpush1.bf16.msra.mxu0 %v175
    %196 = vmatprep.subr.bf16.mxu0 0
    %197 = vmatpush1.bf16.msra.mxu0 %v176
    %198 = vmatprep.subr.bf16.mxu0 0
    %199 = vmatpush1.bf16.msra.mxu0 %v177
    %200 = vmatprep.subr.bf16.mxu0 0
    %201 = vmatpush1.bf16.msra.mxu0 %v178
    %202 = vmatprep.subr.bf16.mxu0 0
    %203 = vmatpush1.bf16.msra.mxu0 %v179
    %204 = vmatprep.subr.bf16.mxu0 0
    %205 = vmatpush1.bf16.msra.mxu0 0
    %206 = vmatprep.subr.bf16.mxu0 0
    %207 = vmatpush1.bf16.msra.mxu0 0
    %208 = vmatprep.subr.bf16.mxu0 0
    %209 = vmatpush1.bf16.msra.mxu0 0
    %210 = vmatprep.subr.bf16.mxu0 0
    %211 = vmatpush1.bf16.msra.mxu0 0
    %212 = vmatprep.subr.bf16.mxu0 0
    %213 = vmatpush1.bf16.msra.mxu0 0
    %214 = vmatprep.subr.bf16.mxu0 0
    %215 = vmatpush1.bf16.msra.mxu0 0
    %216 = vmatprep.subr.bf16.mxu0 0
    %217 = vmatpush1.bf16.msra.mxu0 0
    %218 = vmatprep.subr.bf16.mxu0 0
    %219 = vmatpush1.bf16.msra.mxu0 0
    %220 = vmatprep.mubr.bf16.mxu0 0
    %221 = vmatmul.mubr.bf16.gmra.mrb[0].mxu0 %v124
    %v222 = vpop.f32.mrb[0].mxu0
    %v223 = vadd.f32 0.0, %v222
    %v224 = vpop.f32.mrb[0].mxu0
    %v225 = vpop.f32.mrb[0].mxu0
    %v226 = vadd.f32 0.0, %v225
    %v227 = vpop.f32.mrb[0].mxu0
    %228 = vmatprep.mubr.bf16.mxu0 0
    %229 = vmatmul.mubr.bf16.gmra.mrb[0].mxu0 %v125
    %v230 = vpop.f32.mrb[0].mxu0
    %v231 = vadd.f32 0.0, %v230
    %v232 = vpop.f32.mrb[0].mxu0
    %v233 = vpop.f32.mrb[0].mxu0
    %v234 = vadd.f32 0.0, %v233
    %v235 = vpop.f32.mrb[0].mxu0
    %236 = vmatprep.mubr.bf16.mxu0 0
    %237 = vmatmul.mubr.bf16.gmra.mrb[0].mxu0 %v126
    %v238 = vpop.f32.mrb[0].mxu0
    %v239 = vadd.f32 0.0, %v238
    %v240 = vpop.f32.mrb[0].mxu0
    %v241 = vpop.f32.mrb[0].mxu0
    %v242 = vadd.f32 0.0, %v241
    %v243 = vpop.f32.mrb[0].mxu0
    %244 = vmatprep.mubr.bf16.mxu0 0
    %245 = vmatmul.mubr.bf16.gmra.mrb[0].mxu0 %v127
    %v246 = vpop.f32.mrb[0].mxu0
    %v247 = vadd.f32 0.0, %v246
    %v248 = vpop.f32.mrb[0].mxu0
    %v249 = vpop.f32.mrb[0].mxu0
    %v250 = vadd.f32 0.0, %v249
    %v251 = vpop.f32.mrb[0].mxu0
    %252 = vmatprep.mubr.bf16.mxu0 0
    %253 = vmatmul.mubr.bf16.gmra.mrb[0].mxu0 %v128
    %v254 = vpop.f32.mrb[0].mxu0
    %v255 = vadd.f32 0.0, %v254
    %v256 = vpop.f32.mrb[0].mxu0
    %v257 = vpop.f32.mrb[0].mxu0
    %v258 = vadd.f32 0.0, %v257
    %v259 = vpop.f32.mrb[0].mxu0
    %260 = vmatprep.mubr.bf16.mxu0 0
    %261 = vmatmul.mubr.bf16.gmra.mrb[0].mxu0 %v129
    %v262 = vpop.f32.mrb[0].mxu0
    %v263 = vadd.f32 0.0, %v262
    %v264 = vpop.f32.mrb[0].mxu0
    %v265 = vpop.f32.mrb[0].mxu0
    %v266 = vadd.f32 0.0, %v265
    %v267 = vpop.f32.mrb[0].mxu0
    %268 = vmatprep.mubr.bf16.mxu0 0
    %269 = vmatmul.mubr.bf16.gmra.mrb[0].mxu0 %v130
    %v270 = vpop.f32.mrb[0].mxu0
    %v271 = vadd.f32 0.0, %v270
    %v272 = vpop.f32.mrb[0].mxu0
    %v273 = vpop.f32.mrb[0].mxu0
    %v274 = vadd.f32 0.0, %v273
    %v275 = vpop.f32.mrb[0].mxu0
    %276 = vmatprep.mubr.bf16.mxu0 0
    %277 = vmatmul.mubr.bf16.gmra.mrb[0].mxu0 %v131
    %v278 = vpop.f32.mrb[0].mxu0
    %v279 = vadd.f32 0.0, %v278
    %v280 = vpop.f32.mrb[0].mxu0
    %v281 = vpop.f32.mrb[0].mxu0
    %v282 = vadd.f32 0.0, %v281
    %v283 = vpop.f32.mrb[0].mxu0
    %284 = vdwg.mxu0
    %v285 = vld [vmem:[#allocation7] sm:$0xf]
    %v286 = vld [vmem:[#allocation7 + $0x4] sm:$0xf]
    %v287 = vld [vmem:[#allocation7 + $0x8] sm:$0xf]
    %v288 = vld [vmem:[#allocation7 + $0xc] sm:$0xf]
    %v289 = vld [vmem:[#allocation7 + $0x10] sm:$0xf]
    %v290 = vld [vmem:[#allocation7 + $0x14] sm:$0xf]
    %v291 = vld [vmem:[#allocation7 + $0x18] sm:$0xf]
    %v292 = vld [vmem:[#allocation7 + $0x1c] sm:$0xf]
    %v293 = vld [vmem:[#allocation7 + $0x20] sm:$0xf]
    %v294 = vld [vmem:[#allocation7 + $0x24] sm:$0xf]
    %v295 = vld [vmem:[#allocation7 + $0x28] sm:$0xf]
    %v296 = vld [vmem:[#allocation7 + $0x2c] sm:$0xf]
    %v297 = vld [vmem:[#allocation7 + $0x30] sm:$0xf]
    %v298 = vld [vmem:[#allocation7 + $0x34] sm:$0xf]
    %v299 = vld [vmem:[#allocation7 + $0x38] sm:$0xf]
    %v300 = vld [vmem:[#allocation7 + $0x3c] sm:$0xf]
    %v301 = vpack.c.bf16 %v226, %v223
    %v302 = vpack.c.bf16 %v234, %v231
    %v303 = vpack.c.bf16 %v242, %v239
    %v304 = vpack.c.bf16 %v250, %v247
    %v305 = vpack.c.bf16 %v258, %v255
    %v306 = vpack.c.bf16 %v266, %v263
    %v307 = vpack.c.bf16 %v274, %v271
    %v308 = vpack.c.bf16 %v282, %v279
    %v309 = vld [vmem:[%s3] sm:$0x1]
    %v311 = vlaneseq
    %v312 = vshrl.u32 %v311, 7
    %v313 = vsub.s32 0, %v312
    %v314 = vrot.slane %v309, %v313
    %v332 = vunpack.c.l.b16 %v285
    %v333 = vunpack.c.l.b16 %v286
    %v334 = vunpack.c.l.b16 %v287
    %v335 = vunpack.c.l.b16 %v288
    %v336 = vunpack.c.l.b16 %v289
    %v337 = vunpack.c.l.b16 %v290
    %v338 = vunpack.c.l.b16 %v291
    %v339 = vunpack.c.l.b16 %v292
    %v340 = vunpack.c.l.b16 %v293
    %v341 = vunpack.c.l.b16 %v294
    %v342 = vunpack.c.l.b16 %v295
    %v343 = vunpack.c.l.b16 %v296
    %v344 = vunpack.c.l.b16 %v297
    %v345 = vunpack.c.l.b16 %v298
    %v346 = vunpack.c.l.b16 %v299
    %v347 = vunpack.c.l.b16 %v300
    %v348 = vpack.c.b16 %v333, %v332
    %v349 = vpack.c.b16 %v335, %v334
    %v350 = vpack.c.b16 %v337, %v336
    %v351 = vpack.c.b16 %v339, %v338
    %v352 = vpack.c.b16 %v341, %v340
    %v353 = vpack.c.b16 %v343, %v342
    %v354 = vpack.c.b16 %v345, %v344
    %v355 = vpack.c.b16 %v347, %v346
    %364 = vmatprep.subr.bf16.mxu0 0
    %365 = vmatpush1.bf16.msra.mxu0 %v301
    %366 = vmatprep.subr.bf16.mxu0 0
    %367 = vmatpush1.bf16.msra.mxu0 %v302
    %368 = vmatprep.subr.bf16.mxu0 0
    %369 = vmatpush1.bf16.msra.mxu0 %v303
    %370 = vmatprep.subr.bf16.mxu0 0
    %371 = vmatpush1.bf16.msra.mxu0 %v304
    %372 = vmatprep.subr.bf16.mxu0 0
    %373 = vmatpush1.bf16.msra.mxu0 %v305
    %374 = vmatprep.subr.bf16.mxu0 0
    %375 = vmatpush1.bf16.msra.mxu0 %v306
    %376 = vmatprep.subr.bf16.mxu0 0
    %377 = vmatpush1.bf16.msra.mxu0 %v307
    %378 = vmatprep.subr.bf16.mxu0 0
    %379 = vmatpush1.bf16.msra.mxu0 %v308
    %380 = vmatprep.subr.bf16.mxu0 0
    %381 = vmatpush1.bf16.msra.mxu0 0
    %382 = vmatprep.subr.bf16.mxu0 0
    %383 = vmatpush1.bf16.msra.mxu0 0
    %384 = vmatprep.subr.bf16.mxu0 0
    %385 = vmatpush1.bf16.msra.mxu0 0
    %386 = vmatprep.subr.bf16.mxu0 0
    %387 = vmatpush1.bf16.msra.mxu0 0
    %388 = vmatprep.subr.bf16.mxu0 0
    %389 = vmatpush1.bf16.msra.mxu0 0
    %390 = vmatprep.subr.bf16.mxu0 0
    %391 = vmatpush1.bf16.msra.mxu0 0
    %392 = vmatprep.subr.bf16.mxu0 0
    %393 = vmatpush1.bf16.msra.mxu0 0
    %394 = vmatprep.subr.bf16.mxu0 0
    %395 = vmatpush1.bf16.msra.mxu0 0
    %396 = vmatprep.mubr.bf16.mxu0 0
    %397 = vmatmul.mubr.bf16.gmra.mrb[0].mxu0 %v348
    %v398 = vpop.f32.mrb[0].mxu0
    %v399 = vadd.f32 %v314, %v398
    %v400 = vpop.f32.mrb[0].mxu0
    %v401 = vpop.f32.mrb[0].mxu0
    %v402 = vadd.f32 %v314, %v401
    %v403 = vpop.f32.mrb[0].mxu0
    %404 = vmatprep.mubr.bf16.mxu0 0
    %405 = vmatmul.mubr.bf16.gmra.mrb[0].mxu0 %v349
    %v406 = vpop.f32.mrb[0].mxu0
    %v407 = vadd.f32 %v314, %v406
    %v408 = vpop.f32.mrb[0].mxu0
    %v409 = vpop.f32.mrb[0].mxu0
    %v410 = vadd.f32 %v314, %v409
    %v411 = vpop.f32.mrb[0].mxu0
    %412 = vmatprep.mubr.bf16.mxu0 0
    %413 = vmatmul.mubr.bf16.gmra.mrb[0].mxu0 %v350
    %v414 = vpop.f32.mrb[0].mxu0
    %v415 = vadd.f32 %v314, %v414
    %v416 = vpop.f32.mrb[0].mxu0
    %v417 = vpop.f32.mrb[0].mxu0
    %v418 = vadd.f32 %v314, %v417
    %v419 = vpop.f32.mrb[0].mxu0
    %420 = vmatprep.mubr.bf16.mxu0 0
    %421 = vmatmul.mubr.bf16.gmra.mrb[0].mxu0 %v351
    %v422 = vpop.f32.mrb[0].mxu0
    %v423 = vadd.f32 %v314, %v422
    %v424 = vpop.f32.mrb[0].mxu0
    %v425 = vpop.f32.mrb[0].mxu0
    %v426 = vadd.f32 %v314, %v425
    %v427 = vpop.f32.mrb[0].mxu0
    %428 = vmatprep.mubr.bf16.mxu0 0
    %429 = vmatmul.mubr.bf16.gmra.mrb[0].mxu0 %v352
    %v430 = vpop.f32.mrb[0].mxu0
    %v431 = vadd.f32 %v314, %v430
    %v432 = vpop.f32.mrb[0].mxu0
    %v433 = vpop.f32.mrb[0].mxu0
    %v434 = vadd.f32 %v314, %v433
    %v435 = vpop.f32.mrb[0].mxu0
    %436 = vmatprep.mubr.bf16.mxu0 0
    %437 = vmatmul.mubr.bf16.gmra.mrb[0].mxu0 %v353
    %v438 = vpop.f32.mrb[0].mxu0
    %v439 = vadd.f32 %v314, %v438
    %v440 = vpop.f32.mrb[0].mxu0
    %v441 = vpop.f32.mrb[0].mxu0
    %v442 = vadd.f32 %v314, %v441
    %v443 = vpop.f32.mrb[0].mxu0
    %444 = vmatprep.mubr.bf16.mxu0 0
    %445 = vmatmul.mubr.bf16.gmra.mrb[0].mxu0 %v354
    %v446 = vpop.f32.mrb[0].mxu0
    %v447 = vadd.f32 %v314, %v446
    %v448 = vpop.f32.mrb[0].mxu0
    %v449 = vpop.f32.mrb[0].mxu0
    %v450 = vadd.f32 %v314, %v449
    %v451 = vpop.f32.mrb[0].mxu0
    %452 = vmatprep.mubr.bf16.mxu0 0
    %453 = vmatmul.mubr.bf16.gmra.mrb[0].mxu0 %v355
    %v454 = vpop.f32.mrb[0].mxu0
    %v455 = vadd.f32 %v314, %v454
    %v456 = vpop.f32.mrb[0].mxu0
    %v457 = vpop.f32.mrb[0].mxu0
    %v458 = vadd.f32 %v314, %v457
    %v459 = vpop.f32.mrb[0].mxu0
    %460 = vdwg.mxu0
    %461 = vst [vmem:[#allocation8] sm:$0xff] %v399
    %462 = vst [vmem:[#allocation8 + $0x8] sm:$0xff] %v402
    %463 = vst [vmem:[#allocation8 + $0x10] sm:$0xff] %v407
    %464 = vst [vmem:[#allocation8 + $0x18] sm:$0xff] %v410
    %465 = vst [vmem:[#allocation8 + $0x20] sm:$0xff] %v415
    %466 = vst [vmem:[#allocation8 + $0x28] sm:$0xff] %v418
    %467 = vst [vmem:[#allocation8 + $0x30] sm:$0xff] %v423
    %468 = vst [vmem:[#allocation8 + $0x38] sm:$0xff] %v426
    %469 = vst [vmem:[#allocation8 + $0x40] sm:$0xff] %v431
    %470 = vst [vmem:[#allocation8 + $0x48] sm:$0xff] %v434
    %471 = vst [vmem:[#allocation8 + $0x50] sm:$0xff] %v439
    %472 = vst [vmem:[#allocation8 + $0x58] sm:$0xff] %v442
    %473 = vst [vmem:[#allocation8 + $0x60] sm:$0xff] %v447
    %474 = vst [vmem:[#allocation8 + $0x68] sm:$0xff] %v450
    %475 = vst [vmem:[#allocation8 + $0x70] sm:$0xff] %v455
    %476 = vst [vmem:[#allocation8 + $0x78] sm:$0xff] %v458
    // Predicated region
    $region30: #{tpu_custom_call.1} parent=1 // pred_check
      _
    $region31: #{tpu_custom_call.1} parent=1 // pred_check_branch
      %478 = sbr.rel (0) target = $region33
    $region32: #{tpu_custom_call.1} parent=1 // pred_region
      %s480 = ssub.s32 2048, 2048
      %481 = vsyncadd [#allocation4], %s480
      %s482 = sshll.u32 [#allocation8], 4
      %s483 = int_to_ptr.vmem [resolvable:$true] %s482
      %488 = dma.vmem_to_hbm [thread:$0]  %s483, 2048, %s4, [#allocation4], 128, 128, 8
    $region33: #{tpu_custom_call.1} parent=1 // pred_fallthru
      _
    // Predicated region
    $region34: #{tpu_custom_call.1} parent=1 // pred_check
      _
    $region35: #{tpu_custom_call.1} parent=1 // pred_check_branch
      %490 = sbr.rel (0) target = $region37
    $region36: #{tpu_custom_call.1} parent=1 // pred_region
      %491 = dma.done [#allocation4], 2048
    $region37: #{tpu_custom_call.1} parent=1 // pred_fallthru
      _
    %492 = vsyncpa [#allocation3], 1
    %493 = vsyncpa [#allocation6], 1
    %494 = vsyncpa [#allocation4], 1

</llo_original>
